<compile_context>
chip_gen: v7x
topology: tpu7x:2x2x1
jax: 0.10.0
libtpu: 0.0.40
codegen_flags: <defaults>
</compile_context>

<pallas_src>
import functools
import math

import jax
import jax.numpy as jnp
from jax.experimental import pallas as pl
from jax.experimental.pallas import tpu as pltpu

LOG2 = math.log(2.0)


# ----------------------------------------------------------------------------
# Architecture derivation (mirrors encoder.__init__ exactly)
# ----------------------------------------------------------------------------
def build_layer_dims(n_inputs, n_outputs, base=2, expand=False):
    n_first = 0
    while base ** n_first < n_inputs:
        n_first += 1
    n_first = base ** (n_first - 1)
    if expand:
        n_first = base ** n_first
    n_last = 0
    while base ** n_last < n_outputs:
        n_last += 1
    n_last = base ** n_last

    dims = []
    if n_first != n_inputs:
        dims.append((n_inputs, n_first))
    n_hidden = n_first
    while n_hidden > n_last:
        dims.append((n_hidden, int(n_hidden / base)))
        n_hidden = int(n_hidden / base)
    if n_last != n_outputs:
        dims.append((n_last, n_outputs))
    return dims


def init_params(key, dims):
    """PyTorch init: W ~ N(0, sqrt(1/in_features)), b = 0 (W stored transposed)."""
    params = []
    for fan_in, fan_out in dims:
        key, kw = jax.random.split(key)
        w = jax.random.normal(kw, (fan_in, fan_out), jnp.float32) * jnp.sqrt(1.0 / fan_in)
        b = jnp.zeros((1, fan_out), jnp.float32)
        params.append((w, b))
    return params


# ----------------------------------------------------------------------------
# Device-generation config
# ----------------------------------------------------------------------------
def _device_config():
    """Returns (use_bf16_activation_math, num_tensorcores_per_chip)."""
    try:
        kind = jax.devices()[0].device_kind.lower()
    except Exception:
        return False, 1
    num_tc = 2 if ("v7" in kind or "tpu7" in kind) else 1
    # v5e and older have no bf16 VPU/EUP datapath -> keep activation math f32.
    old_gen = any(g in kind for g in ("v2", "v3", "v4", "v5"))
    return (not old_gen), num_tc


def _round_up(x, m):
    return ((x + m - 1) // m) * m


# ----------------------------------------------------------------------------
# One-time parameter packing (outside the kernel)
# ----------------------------------------------------------------------------
def pack_params(params):
    """Pack the triangle MLP into:
         w0_packed : (k0, d_pad)        bf16   first-layer weight, true K kept
         w_rest    : (L-1, d_pad, d_pad) bf16  layers 1..L-1, carlosPlus-scaled
         b_packed  : (L, 1, d_pad)      f32    biases with carlosPlus fold
    Zero padding keeps padded lanes harmless (padded weight ROWS are zero)."""
    dims = [(w.shape[0], w.shape[1]) for w, _ in params]
    n_layers = len(params)
    widths = [fo for _, fo in dims] + [fi for fi, _ in dims[1:]]
    d_pad = _round_up(max(widths), 128)
    k0 = _round_up(dims[0][0], 16)            # bf16 sublane packing granule

    # layer 0: no activation feeds into it, so no fold.
    w0, b0 = params[0]
    w0_p = (jnp.zeros((k0, d_pad), jnp.float32)
            .at[:dims[0][0], :dims[0][1]].set(w0)).astype(jnp.bfloat16)
    b_slabs = [jnp.zeros((1, d_pad), jnp.float32).at[:, :dims[0][1]].set(b0)]

    w_slabs = []
    for i in range(1, n_layers):
        w, b = params[i]
        fan_in, fan_out = dims[i]
        # previous layer emits s = softplus(z); true activation is 2*s - 2*log2:
        #   z_next = s @ (2W) + (b - log2 * colsum(2W)).
        # Round 2W to bf16 FIRST so the bias correction matches the kernel math.
        w_eff16 = (2.0 * w).astype(jnp.bfloat16)
        b_eff = b - LOG2 * jnp.sum(w_eff16.astype(jnp.float32), axis=0, keepdims=True)
        w_slabs.append(jnp.zeros((d_pad, d_pad), jnp.bfloat16)
                       .at[:fan_in, :fan_out].set(w_eff16))
        b_slabs.append(jnp.zeros((1, d_pad), jnp.float32).at[:, :fan_out].set(b_eff))

    if w_slabs:
        w_rest = jnp.stack(w_slabs)
    else:  # degenerate single-layer net: tiny dummy slab, never read
        w_rest = jnp.zeros((1, d_pad, d_pad), jnp.bfloat16)
    b_packed = jnp.stack(b_slabs)
    return w0_p, w_rest, b_packed


# ----------------------------------------------------------------------------
# Pallas kernel: whole fused MLP per batch tile
# ----------------------------------------------------------------------------
def _encoder_kernel(n_layers, act_dtype, x_ref, w0_ref, w_ref, b_ref, o_ref):
    def softplus(z):
        # numerically stable; log(1+exp) kept (log1p has no guaranteed Mosaic
        # lowering and the accuracy delta is below bf16/f32 noise here).
        return jnp.maximum(z, 0.0) + jnp.log(1.0 + jnp.exp(-jnp.abs(z)))

    # layer 0: true-K matmul against the unpadded-K first-layer weight.
    z = jnp.dot(x_ref[...], w0_ref[...],
                preferred_element_type=jnp.float32) + b_ref[0]
    h = softplus(z.astype(act_dtype))           # bf16 on v6e/v7x, f32 on v5e
    for i in range(1, n_layers):
        z = jnp.dot(h.astype(jnp.bfloat16), w_ref[i - 1],
                    preferred_element_type=jnp.float32) + b_ref[i]
        h = softplus(z.astype(act_dtype))
    # final carlosPlus affine (earlier layers' affine is folded into params)
    o_ref[...] = 2.0 * h.astype(jnp.float32) - 2.0 * LOG2


def encoder_forward(x, w0_packed, w_rest, b_packed, n_outputs, block_b=None):
    """Fused triangle-MLP encoder.  x is passed unpadded (bf16 cast only);
    one pallas_call with a parallel batch grid; real outputs sliced out."""
    batch, n_in = x.shape
    n_layers = b_packed.shape[0]
    k0, d_pad = w0_packed.shape

    use_bf16_act, num_tc = _device_config()
    act_dtype = jnp.bfloat16 if use_bf16_act else jnp.float32

    # Batch tile: split over TensorCores on multi-TC chips; cap so live
    # activations stay under ~half the vreg file (f32: 128 rows, bf16: 256).
    bb_cap = 256 if use_bf16_act else 128
    if block_b is not None:
        bb_cap = min(bb_cap, block_b)
    per_core = -(-batch // num_tc)
    bb = min(bb_cap, _round_up(per_core, 16))
    b_pad = _round_up(batch, bb)

    # bf16 MXU operand; pad only if grid/sublane packing actually requires it
    x_in = x.astype(jnp.bfloat16)
    if b_pad != batch or k0 != n_in:
        x_in = jnp.pad(x_in, ((0, b_pad - batch), (0, k0 - n_in)))

    out = pl.pallas_call(
        functools.partial(_encoder_kernel, n_layers, act_dtype),
        out_shape=jax.ShapeDtypeStruct((b_pad, d_pad), jnp.float32),
        grid_spec=pltpu.PrefetchScalarGridSpec(
            num_scalar_prefetch=0,
            grid=(b_pad // bb,),
            in_specs=[
                pl.BlockSpec((bb, k0), lambda i: (i, 0)),
                pl.BlockSpec((k0, d_pad), lambda i: (0, 0)),
                pl.BlockSpec(w_rest.shape, lambda i: (0, 0, 0)),
                pl.BlockSpec((n_layers, 1, d_pad), lambda i: (0, 0, 0)),
            ],
            out_specs=pl.BlockSpec((bb, d_pad), lambda i: (i, 0)),
        ),
        compiler_params=pltpu.CompilerParams(
            dimension_semantics=("parallel",)),
    )(x_in, w0_packed, w_rest, b_packed)

    return out[:batch, :n_outputs]


# ----------------------------------------------------------------------------
# Pure-JAX f32 reference (matches the PyTorch forward exactly)
# ----------------------------------------------------------------------------
def ref_forward(x, params):
    h = x
    for w, b in params:
        h = 2.0 * (jax.nn.softplus(h @ w + b) - LOG2)
    return h


# ----------------------------------------------------------------------------
if __name__ == "__main__":
    # encoder(nInputs=48, nOutputs=5, base=2, expand=False)
    # -> layers (48,32) (32,16) (16,8) (8,5), carlosPlus after every layer.
    n_inputs, n_outputs, base, expand = 48, 5, 2, False
    batch = 128   # amortizes launch/DMA, fills the MXU M dimension

    dims = build_layer_dims(n_inputs, n_outputs, base, expand)
    key = jax.random.PRNGKey(0)
    key, kx, kp = jax.random.split(key, 3)
    params = init_params(kp, dims)
    x = jax.random.normal(kx, (batch, n_inputs), jnp.float32)

    w0_packed, w_rest, b_packed = pack_params(params)

    fwd = jax.jit(functools.partial(encoder_forward, n_outputs=n_outputs))
    out = fwd(x, w0_packed, w_rest, b_packed)
    jax.block_until_ready(out)

    out_ref = ref_forward(x, params)
    assert out.shape == out_ref.shape, (out.shape, out_ref.shape)
    use_bf16_act, _ = _device_config()
    # bf16 MXU operands (+ bf16 softplus on v6e/v7x) vs f32 reference
    tol = 5e-2 if use_bf16_act else 3e-2
    max_err = float(jnp.max(jnp.abs(out - out_ref)))
    assert jnp.allclose(out, out_ref, atol=tol, rtol=tol), f"max abs err {max_err}"

    print("KERNEL_OK")
</pallas_src>

<mosaic_0001>
module attributes {stable_mosaic.version = 11 : i64} {
  func.func @_encoder_kernel(%arg0: i32, %arg1: memref<128x48xbf16, #tpu.memory_space<vmem>>, %arg2: memref<48x128xbf16, #tpu.memory_space<vmem>>, %arg3: memref<3x128x128xbf16, #tpu.memory_space<vmem>>, %arg4: memref<4x1x128xf32, #tpu.memory_space<vmem>>, %arg5: memref<128x128xf32, #tpu.memory_space<vmem>>) attributes {dimension_semantics = [#tpu.dimension_semantics<parallel>], iteration_bounds = array<i64: 1>, scalar_prefetch = 0 : i64, scratch_operands = 0 : i64, tpu.core_type = #tpu.core_type<tc>, window_params = [{transform_indices = @transform_0, window_bounds = array<i64: 128, 48>}, {pipeline_mode = #tpu.pipeline_mode<synchronous>, transform_indices = @transform_1, window_bounds = array<i64: 48, 128>}, {pipeline_mode = #tpu.pipeline_mode<synchronous>, transform_indices = @transform_2, window_bounds = array<i64: 3, 128, 128>}, {pipeline_mode = #tpu.pipeline_mode<synchronous>, transform_indices = @transform_3, window_bounds = array<i64: 4, 1, 128>}, {transform_indices = @transform_4, window_bounds = array<i64: 128, 128>}]} {
    %c0 = arith.constant 0 : index
    %c0_0 = arith.constant 0 : index
    %0 = vector.load %arg1[%c0, %c0_0] : memref<128x48xbf16, #tpu.memory_space<vmem>>, vector<128x48xbf16>
    %c0_1 = arith.constant 0 : index
    %c0_2 = arith.constant 0 : index
    %1 = vector.load %arg2[%c0_1, %c0_2] : memref<48x128xbf16, #tpu.memory_space<vmem>>, vector<48x128xbf16>
    %cst = arith.constant dense<0.000000e+00> : vector<128x128xf32>
    %2 = tpu.matmul %0, %1, %cst {dimension_numbers = #tpu.dot_dimension_numbers<[1], [0], [0], [1], [0, 0, 1, 1], [], []>} : vector<128x48xbf16>, vector<48x128xbf16>, vector<128x128xf32> -> vector<128x128xf32>
    %c0_3 = arith.constant 0 : index
    %c0_4 = arith.constant 0 : index
    %c0_5 = arith.constant 0 : index
    %3 = vector.load %arg4[%c0_3, %c0_4, %c0_5] : memref<4x1x128xf32, #tpu.memory_space<vmem>>, vector<1x1x128xf32>
    %4 = vector.shape_cast %3 : vector<1x1x128xf32> to vector<1x128xf32>
    %5 = vector.broadcast %4 : vector<1x128xf32> to vector<128x128xf32>
    %6 = arith.addf %2, %5 : vector<128x128xf32>
    %7 = arith.truncf %6 : vector<128x128xf32> to vector<128x128xbf16>
    %cst_6 = arith.constant 0.000000e+00 : bf16
    %8 = vector.broadcast %cst_6 : bf16 to vector<128x128xbf16>
    %9 = arith.maximumf %7, %8 : vector<128x128xbf16>
    %10 = math.absf %7 : vector<128x128xbf16>
    %cst_7 = arith.constant 0.000000e+00 : bf16
    %11 = vector.broadcast %cst_7 : bf16 to vector<128x128xbf16>
    %12 = arith.subf %11, %10 : vector<128x128xbf16>
    %13 = math.exp %12 : vector<128x128xbf16>
    %cst_8 = arith.constant 1.000000e+00 : bf16
    %14 = vector.broadcast %cst_8 : bf16 to vector<128x128xbf16>
    %15 = arith.addf %14, %13 : vector<128x128xbf16>
    %16 = math.log %15 : vector<128x128xbf16>
    %17 = arith.addf %9, %16 : vector<128x128xbf16>
    %c0_9 = arith.constant 0 : index
    %c0_10 = arith.constant 0 : index
    %c0_11 = arith.constant 0 : index
    %18 = vector.load %arg3[%c0_9, %c0_10, %c0_11] : memref<3x128x128xbf16, #tpu.memory_space<vmem>>, vector<1x128x128xbf16>
    %19 = vector.shape_cast %18 : vector<1x128x128xbf16> to vector<128x128xbf16>
    %cst_12 = arith.constant dense<0.000000e+00> : vector<128x128xf32>
    %20 = tpu.matmul %17, %19, %cst_12 {dimension_numbers = #tpu.dot_dimension_numbers<[1], [0], [0], [1], [0, 0, 1, 1], [], []>} : vector<128x128xbf16>, vector<128x128xbf16>, vector<128x128xf32> -> vector<128x128xf32>
    %c1 = arith.constant 1 : index
    %c0_13 = arith.constant 0 : index
    %c0_14 = arith.constant 0 : index
    %21 = vector.load %arg4[%c1, %c0_13, %c0_14] : memref<4x1x128xf32, #tpu.memory_space<vmem>>, vector<1x1x128xf32>
    %22 = vector.shape_cast %21 : vector<1x1x128xf32> to vector<1x128xf32>
    %23 = vector.broadcast %22 : vector<1x128xf32> to vector<128x128xf32>
    %24 = arith.addf %20, %23 : vector<128x128xf32>
    %25 = arith.truncf %24 : vector<128x128xf32> to vector<128x128xbf16>
    %cst_15 = arith.constant 0.000000e+00 : bf16
    %26 = vector.broadcast %cst_15 : bf16 to vector<128x128xbf16>
    %27 = arith.maximumf %25, %26 : vector<128x128xbf16>
    %28 = math.absf %25 : vector<128x128xbf16>
    %cst_16 = arith.constant 0.000000e+00 : bf16
    %29 = vector.broadcast %cst_16 : bf16 to vector<128x128xbf16>
    %30 = arith.subf %29, %28 : vector<128x128xbf16>
    %31 = math.exp %30 : vector<128x128xbf16>
    %cst_17 = arith.constant 1.000000e+00 : bf16
    %32 = vector.broadcast %cst_17 : bf16 to vector<128x128xbf16>
    %33 = arith.addf %32, %31 : vector<128x128xbf16>
    %34 = math.log %33 : vector<128x128xbf16>
    %35 = arith.addf %27, %34 : vector<128x128xbf16>
    %c1_18 = arith.constant 1 : index
    %c0_19 = arith.constant 0 : index
    %c0_20 = arith.constant 0 : index
    %36 = vector.load %arg3[%c1_18, %c0_19, %c0_20] : memref<3x128x128xbf16, #tpu.memory_space<vmem>>, vector<1x128x128xbf16>
    %37 = vector.shape_cast %36 : vector<1x128x128xbf16> to vector<128x128xbf16>
    %cst_21 = arith.constant dense<0.000000e+00> : vector<128x128xf32>
    %38 = tpu.matmul %35, %37, %cst_21 {dimension_numbers = #tpu.dot_dimension_numbers<[1], [0], [0], [1], [0, 0, 1, 1], [], []>} : vector<128x128xbf16>, vector<128x128xbf16>, vector<128x128xf32> -> vector<128x128xf32>
    %c2 = arith.constant 2 : index
    %c0_22 = arith.constant 0 : index
    %c0_23 = arith.constant 0 : index
    %39 = vector.load %arg4[%c2, %c0_22, %c0_23] : memref<4x1x128xf32, #tpu.memory_space<vmem>>, vector<1x1x128xf32>
    %40 = vector.shape_cast %39 : vector<1x1x128xf32> to vector<1x128xf32>
    %41 = vector.broadcast %40 : vector<1x128xf32> to vector<128x128xf32>
    %42 = arith.addf %38, %41 : vector<128x128xf32>
    %43 = arith.truncf %42 : vector<128x128xf32> to vector<128x128xbf16>
    %cst_24 = arith.constant 0.000000e+00 : bf16
    %44 = vector.broadcast %cst_24 : bf16 to vector<128x128xbf16>
    %45 = arith.maximumf %43, %44 : vector<128x128xbf16>
    %46 = math.absf %43 : vector<128x128xbf16>
    %cst_25 = arith.constant 0.000000e+00 : bf16
    %47 = vector.broadcast %cst_25 : bf16 to vector<128x128xbf16>
    %48 = arith.subf %47, %46 : vector<128x128xbf16>
    %49 = math.exp %48 : vector<128x128xbf16>
    %cst_26 = arith.constant 1.000000e+00 : bf16
    %50 = vector.broadcast %cst_26 : bf16 to vector<128x128xbf16>
    %51 = arith.addf %50, %49 : vector<128x128xbf16>
    %52 = math.log %51 : vector<128x128xbf16>
    %53 = arith.addf %45, %52 : vector<128x128xbf16>
    %c2_27 = arith.constant 2 : index
    %c0_28 = arith.constant 0 : index
    %c0_29 = arith.constant 0 : index
    %54 = vector.load %arg3[%c2_27, %c0_28, %c0_29] : memref<3x128x128xbf16, #tpu.memory_space<vmem>>, vector<1x128x128xbf16>
    %55 = vector.shape_cast %54 : vector<1x128x128xbf16> to vector<128x128xbf16>
    %cst_30 = arith.constant dense<0.000000e+00> : vector<128x128xf32>
    %56 = tpu.matmul %53, %55, %cst_30 {dimension_numbers = #tpu.dot_dimension_numbers<[1], [0], [0], [1], [0, 0, 1, 1], [], []>} : vector<128x128xbf16>, vector<128x128xbf16>, vector<128x128xf32> -> vector<128x128xf32>
    %c3 = arith.constant 3 : index
    %c0_31 = arith.constant 0 : index
    %c0_32 = arith.constant 0 : index
    %57 = vector.load %arg4[%c3, %c0_31, %c0_32] : memref<4x1x128xf32, #tpu.memory_space<vmem>>, vector<1x1x128xf32>
    %58 = vector.shape_cast %57 : vector<1x1x128xf32> to vector<1x128xf32>
    %59 = vector.broadcast %58 : vector<1x128xf32> to vector<128x128xf32>
    %60 = arith.addf %56, %59 : vector<128x128xf32>
    %61 = arith.truncf %60 : vector<128x128xf32> to vector<128x128xbf16>
    %cst_33 = arith.constant 0.000000e+00 : bf16
    %62 = vector.broadcast %cst_33 : bf16 to vector<128x128xbf16>
    %63 = arith.maximumf %61, %62 : vector<128x128xbf16>
    %64 = math.absf %61 : vector<128x128xbf16>
    %cst_34 = arith.constant 0.000000e+00 : bf16
    %65 = vector.broadcast %cst_34 : bf16 to vector<128x128xbf16>
    %66 = arith.subf %65, %64 : vector<128x128xbf16>
    %67 = math.exp %66 : vector<128x128xbf16>
    %cst_35 = arith.constant 1.000000e+00 : bf16
    %68 = vector.broadcast %cst_35 : bf16 to vector<128x128xbf16>
    %69 = arith.addf %68, %67 : vector<128x128xbf16>
    %70 = math.log %69 : vector<128x128xbf16>
    %71 = arith.addf %63, %70 : vector<128x128xbf16>
    %72 = arith.extf %71 : vector<128x128xbf16> to vector<128x128xf32>
    %cst_36 = arith.constant 2.000000e+00 : f32
    %73 = vector.broadcast %cst_36 : f32 to vector<128x128xf32>
    %74 = arith.mulf %73, %72 : vector<128x128xf32>
    %cst_37 = arith.constant 1.38629436 : f32
    %75 = vector.broadcast %cst_37 : f32 to vector<128x128xf32>
    %76 = arith.subf %74, %75 : vector<128x128xf32>
    %c0_38 = arith.constant 0 : index
    %c0_39 = arith.constant 0 : index
    %77 = vector.load %arg5[%c0_38, %c0_39] : memref<128x128xf32, #tpu.memory_space<vmem>>, vector<128x128xf32>
    tpu.vector_store %arg5[%c0_38, %c0_39], %76 {strides = array<i32>} : memref<128x128xf32, #tpu.memory_space<vmem>>, vector<128x128xf32>,
    return
  }
  func.func @transform_0(%arg0: i32) -> (i32, i32) {
    %c0_i32 = arith.constant 0 : i32
    %c0_i32_0 = arith.constant 0 : i32
    return %arg0, %c0_i32 : i32, i32
  }
  func.func @transform_1(%arg0: i32) -> (i32, i32) {
    %c0_i32 = arith.constant 0 : i32
    %c0_i32_0 = arith.constant 0 : i32
    %c0_i32_1 = arith.constant 0 : i32
    return %c0_i32, %c0_i32_0 : i32, i32
  }
  func.func @transform_2(%arg0: i32) -> (i32, i32, i32) {
    %c0_i32 = arith.constant 0 : i32
    %c0_i32_0 = arith.constant 0 : i32
    %c0_i32_1 = arith.constant 0 : i32
    %c0_i32_2 = arith.constant 0 : i32
    return %c0_i32, %c0_i32_0, %c0_i32_1 : i32, i32, i32
  }
  func.func @transform_3(%arg0: i32) -> (i32, i32, i32) {
    %c0_i32 = arith.constant 0 : i32
    %c0_i32_0 = arith.constant 0 : i32
    %c0_i32_1 = arith.constant 0 : i32
    %c0_i32_2 = arith.constant 0 : i32
    return %c0_i32, %c0_i32_0, %c0_i32_1 : i32, i32, i32
  }
  func.func @transform_4(%arg0: i32) -> (i32, i32) {
    %c0_i32 = arith.constant 0 : i32
    %c0_i32_0 = arith.constant 0 : i32
    return %arg0, %c0_i32 : i32, i32
  }
}

</mosaic_0001>

<llo_original>
// kernel: encoder_forward.1
$region0: #{encoder_forward.1}
  #allocation0 [shape = 'u32[]', space=smem, size = 0x4, offset = 0x4, fixed_abs, tag = 'smem constant byte address 0x4 - core index']
  #allocation1 [shape = 'u32[144,128]{1,0:T(1,128)}', space=vmem, size = 0x12000, scoped, tag = 'internal scratch']
  %s0 = inlined_call_operand.vmem [shape: bf16[128,48], index: 0, kind: input, shape index: {}]
  %s1 = inlined_call_operand.vmem [shape: bf16[48,128], index: 1, kind: input, shape index: {}]
  %s2 = inlined_call_operand.hbm [shape: bf16[3,128,128], index: 2, kind: input, shape index: {}]
  %s3 = inlined_call_operand.vmem [shape: f32[4,1,128], index: 3, kind: input, shape index: {}]
  %s4 = inlined_call_operand.vmem [shape: f32[128,128], index: 4, kind: output, shape index: {}]
  %s5 = sld [smem:[#allocation0]]
  $region30: #{encoder_forward.1} parent=0
    _
  %s7 = ssub.s32 1, %s5
  %s8 = scalar_select 0, %s7, %s5
  $region1: #{encoder_forward.1} parent=0
    #allocation2 [shape = 'u8[98304]{0}', space=vmem, size = 0x18000, scoped, tag = 'input window, operand 2, single buffered']
    #allocation3 [shape = 's32[1]{0}', space=sflag, size = 0x4, scoped, tag = 'scoped memory for encoder_forward.1']
    %9 = vsyncpa [#allocation3], 0
    // Predicated region
    $region2: #{encoder_forward.1} parent=1 // pred_check
      _
    $region3: #{encoder_forward.1} parent=1 // pred_check_branch
      %11 = sbr.rel (0) target = $region5
    $region4: #{encoder_forward.1} parent=1 // pred_region
      _
    $region5: #{encoder_forward.1} parent=1 // pred_fallthru
      _
    // Predicated region
    $region6: #{encoder_forward.1} parent=1 // pred_check
      _
    $region7: #{encoder_forward.1} parent=1 // pred_check_branch
      %13 = sbr.rel (0) target = $region9
    $region8: #{encoder_forward.1} parent=1 // pred_region
      _
    $region9: #{encoder_forward.1} parent=1 // pred_fallthru
      _
    // Predicated region
    $region10: #{encoder_forward.1} parent=1 // pred_check
      _
    $region11: #{encoder_forward.1} parent=1 // pred_check_branch
      %15 = sbr.rel (0) target = $region13
    $region12: #{encoder_forward.1} parent=1 // pred_region
      %s17 = ssub.s32 3072, 3072
      %18 = vsyncadd [#allocation3], %s17
      %s19 = sshll.u32 [#allocation2], 4
      %s20 = int_to_ptr.vmem [resolvable:$true] %s19
      %25 = dma.hbm_to_vmem [thread:$0]  %s2, 3072, %s20, [#allocation3], 64, 64, 4
    $region13: #{encoder_forward.1} parent=1 // pred_fallthru
      _
    // Predicated region
    $region14: #{encoder_forward.1} parent=1 // pred_check
      _
    $region15: #{encoder_forward.1} parent=1 // pred_check_branch
      %27 = sbr.rel (0) target = $region17
    $region16: #{encoder_forward.1} parent=1 // pred_region
      _
    $region17: #{encoder_forward.1} parent=1 // pred_fallthru
      _
    // Predicated region
    $region18: #{encoder_forward.1} parent=1 // pred_check
      _
    $region19: #{encoder_forward.1} parent=1 // pred_check_branch
      %29 = sbr.rel (0) target = $region21
    $region20: #{encoder_forward.1} parent=1 // pred_region
      %30 = dma.done [#allocation3], 3072
    $region21: #{encoder_forward.1} parent=1 // pred_fallthru
      _
    %v33 = vld [vmem:[%s0] sm:$0xf]
    %v34 = vld [vmem:[%s0 + $0x4] sm:$0xf]
    %v35 = vld [vmem:[%s0 + $0x8] sm:$0xf]
    %v36 = vld [vmem:[%s0 + $0xc] sm:$0xf]
    %v37 = vld [vmem:[%s0 + $0x10] sm:$0xf]
    %v38 = vld [vmem:[%s0 + $0x14] sm:$0xf]
    %v39 = vld [vmem:[%s0 + $0x18] sm:$0xf]
    %v40 = vld [vmem:[%s0 + $0x1c] sm:$0xf]
    %v41 = vld [vmem:[%s0 + $0x20] sm:$0xf]
    %v42 = vld [vmem:[%s0 + $0x24] sm:$0xf]
    %v43 = vld [vmem:[%s0 + $0x28] sm:$0xf]
    %v44 = vld [vmem:[%s0 + $0x2c] sm:$0xf]
    %v45 = vld [vmem:[%s0 + $0x30] sm:$0xf]
    %v46 = vld [vmem:[%s0 + $0x34] sm:$0xf]
    %v47 = vld [vmem:[%s0 + $0x38] sm:$0xf]
    %v48 = vld [vmem:[%s0 + $0x3c] sm:$0xf]
    %v49 = vld [vmem:[%s1] sm:$0xf]
    %v50 = vld [vmem:[%s1 + $0x4] sm:$0xf]
    %v51 = vld [vmem:[%s1 + $0x8] sm:$0xf]
    %v52 = vld [vmem:[%s1 + $0xc] sm:$0xf]
    %v53 = vld [vmem:[%s1 + $0x10] sm:$0xf]
    %v54 = vld [vmem:[%s1 + $0x14] sm:$0xf]
    %v55 = vld [vmem:[%s3] sm:$0x1]
    %v57 = vlaneseq
    %v58 = vshrl.u32 %v57, 7
    %v59 = vsub.s32 0, %v58
    %v60 = vrot.slane %v55, %v59
    %v78 = vunpack.c.l.b16 %v33
    %v79 = vunpack.c.l.b16 %v34
    %v80 = vunpack.c.l.b16 %v35
    %v81 = vunpack.c.l.b16 %v36
    %v82 = vunpack.c.l.b16 %v37
    %v83 = vunpack.c.l.b16 %v38
    %v84 = vunpack.c.l.b16 %v39
    %v85 = vunpack.c.l.b16 %v40
    %v86 = vunpack.c.l.b16 %v41
    %v87 = vunpack.c.l.b16 %v42
    %v88 = vunpack.c.l.b16 %v43
    %v89 = vunpack.c.l.b16 %v44
    %v90 = vunpack.c.l.b16 %v45
    %v91 = vunpack.c.l.b16 %v46
    %v92 = vunpack.c.l.b16 %v47
    %v93 = vunpack.c.l.b16 %v48
    %v94 = vpack.c.b16 %v79, %v78
    %v95 = vpack.c.b16 %v81, %v80
    %v96 = vpack.c.b16 %v83, %v82
    %v97 = vpack.c.b16 %v85, %v84
    %v98 = vpack.c.b16 %v87, %v86
    %v99 = vpack.c.b16 %v89, %v88
    %v100 = vpack.c.b16 %v91, %v90
    %v101 = vpack.c.b16 %v93, %v92
    %v108 = vunpack.c.l.b16 %v49
    %v109 = vunpack.c.l.b16 %v50
    %v110 = vunpack.c.l.b16 %v51
    %v111 = vunpack.c.l.b16 %v52
    %v112 = vunpack.c.l.b16 %v53
    %v113 = vunpack.c.l.b16 %v54
    %v114 = vpack.c.b16 %v109, %v108
    %v115 = vpack.c.b16 %v111, %v110
    %v116 = vpack.c.b16 %v113, %v112
    %vm120 = vcmask 392192
    %v122 = vsel %vm120, %v94, 0
    %v125 = vsel %vm120, %v95, 0
    %v128 = vsel %vm120, %v96, 0
    %v131 = vsel %vm120, %v97, 0
    %v134 = vsel %vm120, %v98, 0
    %v137 = vsel %vm120, %v99, 0
    %v140 = vsel %vm120, %v100, 0
    %v143 = vsel %vm120, %v101, 0
    %145 = vmatprep.subr.bf16.mxu0 0
    %146 = vmatpush1.bf16.msra.mxu0 %v114
    %147 = vmatprep.subr.bf16.mxu0 0
    %148 = vmatpush1.bf16.msra.mxu0 %v115
    %149 = vmatprep.subr.bf16.mxu0 0
    %150 = vmatpush1.bf16.msra.mxu0 %v116
    %151 = vmatprep.subr.bf16.mxu0 0
    %152 = vmatpush1.bf16.msra.mxu0 0
    %153 = vmatprep.subr.bf16.mxu0 0
    %154 = vmatpush1.bf16.msra.mxu0 0
    %155 = vmatprep.subr.bf16.mxu0 0
    %156 = vmatpush1.bf16.msra.mxu0 0
    %157 = vmatprep.subr.bf16.mxu0 0
    %158 = vmatpush1.bf16.msra.mxu0 0
    %159 = vmatprep.subr.bf16.mxu0 0
    %160 = vmatpush1.bf16.msra.mxu0 0
    %161 = vmatprep.subr.bf16.mxu0 0
    %162 = vmatpush1.bf16.msra.mxu0 0
    %163 = vmatprep.subr.bf16.mxu0 0
    %164 = vmatpush1.bf16.msra.mxu0 0
    %165 = vmatprep.subr.bf16.mxu0 0
    %166 = vmatpush1.bf16.msra.mxu0 0
    %167 = vmatprep.subr.bf16.mxu0 0
    %168 = vmatpush1.bf16.msra.mxu0 0
    %169 = vmatprep.subr.bf16.mxu0 0
    %170 = vmatpush1.bf16.msra.mxu0 0
    %171 = vmatprep.subr.bf16.mxu0 0
    %172 = vmatpush1.bf16.msra.mxu0 0
    %173 = vmatprep.subr.bf16.mxu0 0
    %174 = vmatpush1.bf16.msra.mxu0 0
    %175 = vmatprep.subr.bf16.mxu0 0
    %176 = vmatpush1.bf16.msra.mxu0 0
    %177 = vmatprep.mubr.bf16.mxu0 0
    %178 = vmatmul.mubr.bf16.gmra.mrb[0].mxu0 %v122
    %v179 = vpop.f32.mrb[0].mxu0
    %v180 = vadd.f32 %v60, %v179
    %v181 = vpop.f32.mrb[0].mxu0
    %v182 = vpop.f32.mrb[0].mxu0
    %v183 = vadd.f32 %v60, %v182
    %v184 = vpop.f32.mrb[0].mxu0
    %185 = vmatprep.mubr.bf16.mxu0 0
    %186 = vmatmul.mubr.bf16.gmra.mrb[0].mxu0 %v125
    %v187 = vpop.f32.mrb[0].mxu0
    %v188 = vadd.f32 %v60, %v187
    %v189 = vpop.f32.mrb[0].mxu0
    %v190 = vpop.f32.mrb[0].mxu0
    %v191 = vadd.f32 %v60, %v190
    %v192 = vpop.f32.mrb[0].mxu0
    %193 = vmatprep.mubr.bf16.mxu0 0
    %194 = vmatmul.mubr.bf16.gmra.mrb[0].mxu0 %v128
    %v195 = vpop.f32.mrb[0].mxu0
    %v196 = vadd.f32 %v60, %v195
    %v197 = vpop.f32.mrb[0].mxu0
    %v198 = vpop.f32.mrb[0].mxu0
    %v199 = vadd.f32 %v60, %v198
    %v200 = vpop.f32.mrb[0].mxu0
    %201 = vmatprep.mubr.bf16.mxu0 0
    %202 = vmatmul.mubr.bf16.gmra.mrb[0].mxu0 %v131
    %v203 = vpop.f32.mrb[0].mxu0
    %v204 = vadd.f32 %v60, %v203
    %v205 = vpop.f32.mrb[0].mxu0
    %v206 = vpop.f32.mrb[0].mxu0
    %v207 = vadd.f32 %v60, %v206
    %v208 = vpop.f32.mrb[0].mxu0
    %209 = vmatprep.mubr.bf16.mxu0 0
    %210 = vmatmul.mubr.bf16.gmra.mrb[0].mxu0 %v134
    %v211 = vpop.f32.mrb[0].mxu0
    %v212 = vadd.f32 %v60, %v211
    %v213 = vpop.f32.mrb[0].mxu0
    %v214 = vpop.f32.mrb[0].mxu0
    %v215 = vadd.f32 %v60, %v214
    %v216 = vpop.f32.mrb[0].mxu0
    %217 = vmatprep.mubr.bf16.mxu0 0
    %218 = vmatmul.mubr.bf16.gmra.mrb[0].mxu0 %v137
    %v219 = vpop.f32.mrb[0].mxu0
    %v220 = vadd.f32 %v60, %v219
    %v221 = vpop.f32.mrb[0].mxu0
    %v222 = vpop.f32.mrb[0].mxu0
    %v223 = vadd.f32 %v60, %v222
    %v224 = vpop.f32.mrb[0].mxu0
    %225 = vmatprep.mubr.bf16.mxu0 0
    %226 = vmatmul.mubr.bf16.gmra.mrb[0].mxu0 %v140
    %v227 = vpop.f32.mrb[0].mxu0
    %v228 = vadd.f32 %v60, %v227
    %v229 = vpop.f32.mrb[0].mxu0
    %v230 = vpop.f32.mrb[0].mxu0
    %v231 = vadd.f32 %v60, %v230
    %v232 = vpop.f32.mrb[0].mxu0
    %233 = vmatprep.mubr.bf16.mxu0 0
    %234 = vmatmul.mubr.bf16.gmra.mrb[0].mxu0 %v143
    %v235 = vpop.f32.mrb[0].mxu0
    %v236 = vadd.f32 %v60, %v235
    %v237 = vpop.f32.mrb[0].mxu0
    %v238 = vpop.f32.mrb[0].mxu0
    %v239 = vadd.f32 %v60, %v238
    %v240 = vpop.f32.mrb[0].mxu0
    %241 = vdwg.mxu0
    %v242 = vpack.c.bf16 %v183, %v180
    %v243 = vpack.c.bf16 %v191, %v188
    %v244 = vpack.c.bf16 %v199, %v196
    %v245 = vpack.c.bf16 %v207, %v204
    %v246 = vpack.c.bf16 %v215, %v212
    %v247 = vpack.c.bf16 %v223, %v220
    %v248 = vpack.c.bf16 %v231, %v228
    %v249 = vpack.c.bf16 %v239, %v236
    %v250 = vmax.bf16 %v242, 0
    %v251 = vmax.bf16 %v243, 0
    %v252 = vmax.bf16 %v244, 0
    %v253 = vmax.bf16 %v245, 0
    %v254 = vmax.bf16 %v246, 0
    %v255 = vmax.bf16 %v247, 0
    %v256 = vmax.bf16 %v248, 0
    %v257 = vmax.bf16 %v249, 0
    %v258 = vand.u32 2147450879, %v242
    %v259 = vand.u32 2147450879, %v243
    %v260 = vand.u32 2147450879, %v244
    %v261 = vand.u32 2147450879, %v245
    %v262 = vand.u32 2147450879, %v246
    %v263 = vand.u32 2147450879, %v247
    %v264 = vand.u32 2147450879, %v248
    %v265 = vand.u32 2147450879, %v249
    %v266 = vsub.bf16 0, %v258
    %v267 = vsub.bf16 0, %v259
    %v268 = vsub.bf16 0, %v260
    %v269 = vsub.bf16 0, %v261
    %v270 = vsub.bf16 0, %v262
    %v271 = vsub.bf16 0, %v263
    %v272 = vsub.bf16 0, %v264
    %v273 = vsub.bf16 0, %v265
    %v275 = vmul.bf16 %v266, 1069105081
    %v276 = vpow.bf16.pop %v275
    %v278 = vmul.bf16 %v267, 1069105081
    %v279 = vpow.bf16.pop %v278
    %v281 = vmul.bf16 %v268, 1069105081
    %v282 = vpow.bf16.pop %v281
    %v284 = vmul.bf16 %v269, 1069105081
    %v285 = vpow.bf16.pop %v284
    %v287 = vmul.bf16 %v270, 1069105081
    %v288 = vpow.bf16.pop %v287
    %v290 = vmul.bf16 %v271, 1069105081
    %v291 = vpow.bf16.pop %v290
    %v293 = vmul.bf16 %v272, 1069105081
    %v294 = vpow.bf16.pop %v293
    %v296 = vmul.bf16 %v273, 1069105081
    %v297 = vpow.bf16.pop %v296
    %v298 = vadd.bf16 %v276, 1065369472
    %v299 = vadd.bf16 %v279, 1065369472
    %v300 = vadd.bf16 %v282, 1065369472
    %v301 = vadd.bf16 %v285, 1065369472
    %v302 = vadd.bf16 %v288, 1065369472
    %v303 = vadd.bf16 %v291, 1065369472
    %v304 = vadd.bf16 %v294, 1065369472
    %v305 = vadd.bf16 %v297, 1065369472
    %v306 = vlog2.bf16.pop %v298
    %v308 = vmul.bf16 %v306, 1060192049
    %v309 = vlog2.bf16.pop %v299
    %v311 = vmul.bf16 %v309, 1060192049
    %v312 = vlog2.bf16.pop %v300
    %v314 = vmul.bf16 %v312, 1060192049
    %v315 = vlog2.bf16.pop %v301
    %v317 = vmul.bf16 %v315, 1060192049
    %v318 = vlog2.bf16.pop %v302
    %v320 = vmul.bf16 %v318, 1060192049
    %v321 = vlog2.bf16.pop %v303
    %v323 = vmul.bf16 %v321, 1060192049
    %v324 = vlog2.bf16.pop %v304
    %v326 = vmul.bf16 %v324, 1060192049
    %v327 = vlog2.bf16.pop %v305
    %v329 = vmul.bf16 %v327, 1060192049
    %v330 = vadd.bf16 %v250, %v308
    %v331 = vadd.bf16 %v251, %v311
    %v332 = vadd.bf16 %v252, %v314
    %v333 = vadd.bf16 %v253, %v317
    %v334 = vadd.bf16 %v254, %v320
    %v335 = vadd.bf16 %v255, %v323
    %v336 = vadd.bf16 %v256, %v326
    %v337 = vadd.bf16 %v257, %v329
    %v338 = vld [vmem:[#allocation2] sm:$0xf]
    %v339 = vld [vmem:[#allocation2 + $0x4] sm:$0xf]
    %v340 = vld [vmem:[#allocation2 + $0x8] sm:$0xf]
    %v341 = vld [vmem:[#allocation2 + $0xc] sm:$0xf]
    %v342 = vld [vmem:[#allocation2 + $0x10] sm:$0xf]
    %v343 = vld [vmem:[#allocation2 + $0x14] sm:$0xf]
    %v344 = vld [vmem:[#allocation2 + $0x18] sm:$0xf]
    %v345 = vld [vmem:[#allocation2 + $0x1c] sm:$0xf]
    %v346 = vld [vmem:[#allocation2 + $0x20] sm:$0xf]
    %v347 = vld [vmem:[#allocation2 + $0x24] sm:$0xf]
    %v348 = vld [vmem:[#allocation2 + $0x28] sm:$0xf]
    %v349 = vld [vmem:[#allocation2 + $0x2c] sm:$0xf]
    %v350 = vld [vmem:[#allocation2 + $0x30] sm:$0xf]
    %v351 = vld [vmem:[#allocation2 + $0x34] sm:$0xf]
    %v352 = vld [vmem:[#allocation2 + $0x38] sm:$0xf]
    %v353 = vld [vmem:[#allocation2 + $0x3c] sm:$0xf]
    %s354 = scalar_lea.vmem %s3, 1
    %v355 = vld [vmem:[%s354] sm:$0x1]
    %v357 = vlaneseq
    %v358 = vshrl.u32 %v357, 7
    %v359 = vsub.s32 0, %v358
    %v360 = vrot.slane %v355, %v359
    %v378 = vunpack.c.l.b16 %v338
    %v379 = vunpack.c.l.b16 %v339
    %v380 = vunpack.c.l.b16 %v340
    %v381 = vunpack.c.l.b16 %v341
    %v382 = vunpack.c.l.b16 %v342
    %v383 = vunpack.c.l.b16 %v343
    %v384 = vunpack.c.l.b16 %v344
    %v385 = vunpack.c.l.b16 %v345
    %v386 = vunpack.c.l.b16 %v346
    %v387 = vunpack.c.l.b16 %v347
    %v388 = vunpack.c.l.b16 %v348
    %v389 = vunpack.c.l.b16 %v349
    %v390 = vunpack.c.l.b16 %v350
    %v391 = vunpack.c.l.b16 %v351
    %v392 = vunpack.c.l.b16 %v352
    %v393 = vunpack.c.l.b16 %v353
    %v394 = vpack.c.b16 %v379, %v378
    %v395 = vpack.c.b16 %v381, %v380
    %v396 = vpack.c.b16 %v383, %v382
    %v397 = vpack.c.b16 %v385, %v384
    %v398 = vpack.c.b16 %v387, %v386
    %v399 = vpack.c.b16 %v389, %v388
    %v400 = vpack.c.b16 %v391, %v390
    %v401 = vpack.c.b16 %v393, %v392
    %410 = vmatprep.subr.bf16.mxu0 0
    %411 = vmatpush1.bf16.msra.mxu0 %v394
    %412 = vmatprep.subr.bf16.mxu0 0
    %413 = vmatpush1.bf16.msra.mxu0 %v395
    %414 = vmatprep.subr.bf16.mxu0 0
    %415 = vmatpush1.bf16.msra.mxu0 %v396
    %416 = vmatprep.subr.bf16.mxu0 0
    %417 = vmatpush1.bf16.msra.mxu0 %v397
    %418 = vmatprep.subr.bf16.mxu0 0
    %419 = vmatpush1.bf16.msra.mxu0 %v398
    %420 = vmatprep.subr.bf16.mxu0 0
    %421 = vmatpush1.bf16.msra.mxu0 %v399
    %422 = vmatprep.subr.bf16.mxu0 0
    %423 = vmatpush1.bf16.msra.mxu0 %v400
    %424 = vmatprep.subr.bf16.mxu0 0
    %425 = vmatpush1.bf16.msra.mxu0 %v401
    %426 = vmatprep.subr.bf16.mxu0 0
    %427 = vmatpush1.bf16.msra.mxu0 0
    %428 = vmatprep.subr.bf16.mxu0 0
    %429 = vmatpush1.bf16.msra.mxu0 0
    %430 = vmatprep.subr.bf16.mxu0 0
    %431 = vmatpush1.bf16.msra.mxu0 0
    %432 = vmatprep.subr.bf16.mxu0 0
    %433 = vmatpush1.bf16.msra.mxu0 0
    %434 = vmatprep.subr.bf16.mxu0 0
    %435 = vmatpush1.bf16.msra.mxu0 0
    %436 = vmatprep.subr.bf16.mxu0 0
    %437 = vmatpush1.bf16.msra.mxu0 0
    %438 = vmatprep.subr.bf16.mxu0 0
    %439 = vmatpush1.bf16.msra.mxu0 0
    %440 = vmatprep.subr.bf16.mxu0 0
    %441 = vmatpush1.bf16.msra.mxu0 0
    %442 = vmatprep.mubr.bf16.mxu0 0
    %443 = vmatmul.mubr.bf16.gmra.mrb[0].mxu0 %v330
    %v444 = vpop.f32.mrb[0].mxu0
    %v445 = vadd.f32 %v360, %v444
    %v446 = vpop.f32.mrb[0].mxu0
    %v447 = vpop.f32.mrb[0].mxu0
    %v448 = vadd.f32 %v360, %v447
    %v449 = vpop.f32.mrb[0].mxu0
    %450 = vmatprep.mubr.bf16.mxu0 0
    %451 = vmatmul.mubr.bf16.gmra.mrb[0].mxu0 %v331
    %v452 = vpop.f32.mrb[0].mxu0
    %v453 = vadd.f32 %v360, %v452
    %v454 = vpop.f32.mrb[0].mxu0
    %v455 = vpop.f32.mrb[0].mxu0
    %v456 = vadd.f32 %v360, %v455
    %v457 = vpop.f32.mrb[0].mxu0
    %458 = vmatprep.mubr.bf16.mxu0 0
    %459 = vmatmul.mubr.bf16.gmra.mrb[0].mxu0 %v332
    %v460 = vpop.f32.mrb[0].mxu0
    %v461 = vadd.f32 %v360, %v460
    %v462 = vpop.f32.mrb[0].mxu0
    %v463 = vpop.f32.mrb[0].mxu0
    %v464 = vadd.f32 %v360, %v463
    %v465 = vpop.f32.mrb[0].mxu0
    %466 = vmatprep.mubr.bf16.mxu0 0
    %467 = vmatmul.mubr.bf16.gmra.mrb[0].mxu0 %v333
    %v468 = vpop.f32.mrb[0].mxu0
    %v469 = vadd.f32 %v360, %v468
    %v470 = vpop.f32.mrb[0].mxu0
    %v471 = vpop.f32.mrb[0].mxu0
    %v472 = vadd.f32 %v360, %v471
    %v473 = vpop.f32.mrb[0].mxu0
    %474 = vmatprep.mubr.bf16.mxu0 0
    %475 = vmatmul.mubr.bf16.gmra.mrb[0].mxu0 %v334
    %v476 = vpop.f32.mrb[0].mxu0
    %v477 = vadd.f32 %v360, %v476
    %v478 = vpop.f32.mrb[0].mxu0
    %v479 = vpop.f32.mrb[0].mxu0
    %v480 = vadd.f32 %v360, %v479
    %v481 = vpop.f32.mrb[0].mxu0
    %482 = vmatprep.mubr.bf16.mxu0 0
    %483 = vmatmul.mubr.bf16.gmra.mrb[0].mxu0 %v335
    %v484 = vpop.f32.mrb[0].mxu0
    %v485 = vadd.f32 %v360, %v484
    %v486 = vpop.f32.mrb[0].mxu0
    %v487 = vpop.f32.mrb[0].mxu0
    %v488 = vadd.f32 %v360, %v487
    %v489 = vpop.f32.mrb[0].mxu0
    %490 = vmatprep.mubr.bf16.mxu0 0
    %491 = vmatmul.mubr.bf16.gmra.mrb[0].mxu0 %v336
    %v492 = vpop.f32.mrb[0].mxu0
    %v493 = vadd.f32 %v360, %v492
    %v494 = vpop.f32.mrb[0].mxu0
    %v495 = vpop.f32.mrb[0].mxu0
    %v496 = vadd.f32 %v360, %v495
    %v497 = vpop.f32.mrb[0].mxu0
    %498 = vmatprep.mubr.bf16.mxu0 0
    %499 = vmatmul.mubr.bf16.gmra.mrb[0].mxu0 %v337
    %v500 = vpop.f32.mrb[0].mxu0
    %v501 = vadd.f32 %v360, %v500
    %v502 = vpop.f32.mrb[0].mxu0
    %v503 = vpop.f32.mrb[0].mxu0
    %v504 = vadd.f32 %v360, %v503
    %v505 = vpop.f32.mrb[0].mxu0
    %506 = vdwg.mxu0
    %v507 = vpack.c.bf16 %v448, %v445
    %v508 = vpack.c.bf16 %v456, %v453
    %v509 = vpack.c.bf16 %v464, %v461
    %v510 = vpack.c.bf16 %v472, %v469
    %v511 = vpack.c.bf16 %v480, %v477
    %v512 = vpack.c.bf16 %v488, %v485
    %v513 = vpack.c.bf16 %v496, %v493
    %v514 = vpack.c.bf16 %v504, %v501
    %v515 = vmax.bf16 %v507, 0
    %v516 = vmax.bf16 %v508, 0
    %v517 = vmax.bf16 %v509, 0
    %v518 = vmax.bf16 %v510, 0
    %v519 = vmax.bf16 %v511, 0
    %v520 = vmax.bf16 %v512, 0
    %v521 = vmax.bf16 %v513, 0
    %v522 = vmax.bf16 %v514, 0
    %v523 = vand.u32 2147450879, %v507
    %v524 = vand.u32 2147450879, %v508
    %v525 = vand.u32 2147450879, %v509
    %v526 = vand.u32 2147450879, %v510
    %v527 = vand.u32 2147450879, %v511
    %v528 = vand.u32 2147450879, %v512
    %v529 = vand.u32 2147450879, %v513
    %v530 = vand.u32 2147450879, %v514
    %v531 = vsub.bf16 0, %v523
    %v532 = vsub.bf16 0, %v524
    %v533 = vsub.bf16 0, %v525
    %v534 = vsub.bf16 0, %v526
    %v535 = vsub.bf16 0, %v527
    %v536 = vsub.bf16 0, %v528
    %v537 = vsub.bf16 0, %v529
    %v538 = vsub.bf16 0, %v530
    %v540 = vmul.bf16 %v531, 1069105081
    %v541 = vpow.bf16.pop %v540
    %v543 = vmul.bf16 %v532, 1069105081
    %v544 = vpow.bf16.pop %v543
    %v546 = vmul.bf16 %v533, 1069105081
    %v547 = vpow.bf16.pop %v546
    %v549 = vmul.bf16 %v534, 1069105081
    %v550 = vpow.bf16.pop %v549
    %v552 = vmul.bf16 %v535, 1069105081
    %v553 = vpow.bf16.pop %v552
    %v555 = vmul.bf16 %v536, 1069105081
    %v556 = vpow.bf16.pop %v555
    %v558 = vmul.bf16 %v537, 1069105081
    %v559 = vpow.bf16.pop %v558
    %v561 = vmul.bf16 %v538, 1069105081
    %v562 = vpow.bf16.pop %v561
    %v563 = vadd.bf16 %v541, 1065369472
    %v564 = vadd.bf16 %v544, 1065369472
    %v565 = vadd.bf16 %v547, 1065369472
    %v566 = vadd.bf16 %v550, 1065369472
    %v567 = vadd.bf16 %v553, 1065369472
    %v568 = vadd.bf16 %v556, 1065369472
    %v569 = vadd.bf16 %v559, 1065369472
    %v570 = vadd.bf16 %v562, 1065369472
    %v571 = vlog2.bf16.pop %v563
    %v573 = vmul.bf16 %v571, 1060192049
    %v574 = vlog2.bf16.pop %v564
    %v576 = vmul.bf16 %v574, 1060192049
    %v577 = vlog2.bf16.pop %v565
    %v579 = vmul.bf16 %v577, 1060192049
    %v580 = vlog2.bf16.pop %v566
    %v582 = vmul.bf16 %v580, 1060192049
    %v583 = vlog2.bf16.pop %v567
    %v585 = vmul.bf16 %v583, 1060192049
    %v586 = vlog2.bf16.pop %v568
    %v588 = vmul.bf16 %v586, 1060192049
    %v589 = vlog2.bf16.pop %v569
    %v591 = vmul.bf16 %v589, 1060192049
    %v592 = vlog2.bf16.pop %v570
    %v594 = vmul.bf16 %v592, 1060192049
    %v595 = vadd.bf16 %v515, %v573
    %v596 = vadd.bf16 %v516, %v576
    %v597 = vadd.bf16 %v517, %v579
    %v598 = vadd.bf16 %v518, %v582
    %v599 = vadd.bf16 %v519, %v585
    %v600 = vadd.bf16 %v520, %v588
    %v601 = vadd.bf16 %v521, %v591
    %v602 = vadd.bf16 %v522, %v594
    %s603 = scalar_lea.vmem [#allocation2], 64
    %v604 = vld [vmem:[%s603] sm:$0xf]
    %v605 = vld [vmem:[%s603 + $0x4] sm:$0xf]
    %v606 = vld [vmem:[%s603 + $0x8] sm:$0xf]
    %v607 = vld [vmem:[%s603 + $0xc] sm:$0xf]
    %v608 = vld [vmem:[%s603 + $0x10] sm:$0xf]
    %v609 = vld [vmem:[%s603 + $0x14] sm:$0xf]
    %v610 = vld [vmem:[%s603 + $0x18] sm:$0xf]
    %v611 = vld [vmem:[%s603 + $0x1c] sm:$0xf]
    %v612 = vld [vmem:[%s603 + $0x20] sm:$0xf]
    %v613 = vld [vmem:[%s603 + $0x24] sm:$0xf]
    %v614 = vld [vmem:[%s603 + $0x28] sm:$0xf]
    %v615 = vld [vmem:[%s603 + $0x2c] sm:$0xf]
    %v616 = vld [vmem:[%s603 + $0x30] sm:$0xf]
    %v617 = vld [vmem:[%s603 + $0x34] sm:$0xf]
    %v618 = vld [vmem:[%s603 + $0x38] sm:$0xf]
    %v619 = vld [vmem:[%s603 + $0x3c] sm:$0xf]
    %s620 = scalar_lea.vmem %s3, 2
    %v621 = vld [vmem:[%s620] sm:$0x1]
    %v623 = vlaneseq
    %v624 = vshrl.u32 %v623, 7
    %v625 = vsub.s32 0, %v624
    %v626 = vrot.slane %v621, %v625
    %v644 = vunpack.c.l.b16 %v604
    %v645 = vunpack.c.l.b16 %v605
    %v646 = vunpack.c.l.b16 %v606
    %v647 = vunpack.c.l.b16 %v607
    %v648 = vunpack.c.l.b16 %v608
    %v649 = vunpack.c.l.b16 %v609
    %v650 = vunpack.c.l.b16 %v610
    %v651 = vunpack.c.l.b16 %v611
    %v652 = vunpack.c.l.b16 %v612
    %v653 = vunpack.c.l.b16 %v613
    %v654 = vunpack.c.l.b16 %v614
    %v655 = vunpack.c.l.b16 %v615
    %v656 = vunpack.c.l.b16 %v616
    %v657 = vunpack.c.l.b16 %v617
    %v658 = vunpack.c.l.b16 %v618
    %v659 = vunpack.c.l.b16 %v619
    %v660 = vpack.c.b16 %v645, %v644
    %v661 = vpack.c.b16 %v647, %v646
    %v662 = vpack.c.b16 %v649, %v648
    %v663 = vpack.c.b16 %v651, %v650
    %v664 = vpack.c.b16 %v653, %v652
    %v665 = vpack.c.b16 %v655, %v654
    %v666 = vpack.c.b16 %v657, %v656
    %v667 = vpack.c.b16 %v659, %v658
    %676 = vmatprep.subr.bf16.mxu0 0
    %677 = vmatpush1.bf16.msra.mxu0 %v660
    %678 = vmatprep.subr.bf16.mxu0 0
    %679 = vmatpush1.bf16.msra.mxu0 %v661
    %680 = vmatprep.subr.bf16.mxu0 0
    %681 = vmatpush1.bf16.msra.mxu0 %v662
    %682 = vmatprep.subr.bf16.mxu0 0
    %683 = vmatpush1.bf16.msra.mxu0 %v663
    %684 = vmatprep.subr.bf16.mxu0 0
    %685 = vmatpush1.bf16.msra.mxu0 %v664
    %686 = vmatprep.subr.bf16.mxu0 0
    %687 = vmatpush1.bf16.msra.mxu0 %v665
    %688 = vmatprep.subr.bf16.mxu0 0
    %689 = vmatpush1.bf16.msra.mxu0 %v666
    %690 = vmatprep.subr.bf16.mxu0 0
    %691 = vmatpush1.bf16.msra.mxu0 %v667
    %692 = vmatprep.subr.bf16.mxu0 0
    %693 = vmatpush1.bf16.msra.mxu0 0
    %694 = vmatprep.subr.bf16.mxu0 0
    %695 = vmatpush1.bf16.msra.mxu0 0
    %696 = vmatprep.subr.bf16.mxu0 0
    %697 = vmatpush1.bf16.msra.mxu0 0
    %698 = vmatprep.subr.bf16.mxu0 0
    %699 = vmatpush1.bf16.msra.mxu0 0
    %700 = vmatprep.subr.bf16.mxu0 0
    %701 = vmatpush1.bf16.msra.mxu0 0
    %702 = vmatprep.subr.bf16.mxu0 0
    %703 = vmatpush1.bf16.msra.mxu0 0
    %704 = vmatprep.subr.bf16.mxu0 0
    %705 = vmatpush1.bf16.msra.mxu0 0
    %706 = vmatprep.subr.bf16.mxu0 0
    %707 = vmatpush1.bf16.msra.mxu0 0
    %708 = vmatprep.mubr.bf16.mxu0 0
    %709 = vmatmul.mubr.bf16.gmra.mrb[0].mxu0 %v595
    %v710 = vpop.f32.mrb[0].mxu0
    %v711 = vadd.f32 %v626, %v710
    %v712 = vpop.f32.mrb[0].mxu0
    %v713 = vpop.f32.mrb[0].mxu0
    %v714 = vadd.f32 %v626, %v713
    %v715 = vpop.f32.mrb[0].mxu0
    %716 = vmatprep.mubr.bf16.mxu0 0
    %717 = vmatmul.mubr.bf16.gmra.mrb[0].mxu0 %v596
    %v718 = vpop.f32.mrb[0].mxu0
    %v719 = vadd.f32 %v626, %v718
    %v720 = vpop.f32.mrb[0].mxu0
    %v721 = vpop.f32.mrb[0].mxu0
    %v722 = vadd.f32 %v626, %v721
    %v723 = vpop.f32.mrb[0].mxu0
    %724 = vmatprep.mubr.bf16.mxu0 0
    %725 = vmatmul.mubr.bf16.gmra.mrb[0].mxu0 %v597
    %v726 = vpop.f32.mrb[0].mxu0
    %v727 = vadd.f32 %v626, %v726
    %v728 = vpop.f32.mrb[0].mxu0
    %v729 = vpop.f32.mrb[0].mxu0
    %v730 = vadd.f32 %v626, %v729
    %v731 = vpop.f32.mrb[0].mxu0
    %732 = vmatprep.mubr.bf16.mxu0 0
    %733 = vmatmul.mubr.bf16.gmra.mrb[0].mxu0 %v598
    %v734 = vpop.f32.mrb[0].mxu0
    %v735 = vadd.f32 %v626, %v734
    %v736 = vpop.f32.mrb[0].mxu0
    %v737 = vpop.f32.mrb[0].mxu0
    %v738 = vadd.f32 %v626, %v737
    %v739 = vpop.f32.mrb[0].mxu0
    %740 = vmatprep.mubr.bf16.mxu0 0
    %741 = vmatmul.mubr.bf16.gmra.mrb[0].mxu0 %v599
    %v742 = vpop.f32.mrb[0].mxu0
    %v743 = vadd.f32 %v626, %v742
    %v744 = vpop.f32.mrb[0].mxu0
    %v745 = vpop.f32.mrb[0].mxu0
    %v746 = vadd.f32 %v626, %v745
    %v747 = vpop.f32.mrb[0].mxu0
    %748 = vmatprep.mubr.bf16.mxu0 0
    %749 = vmatmul.mubr.bf16.gmra.mrb[0].mxu0 %v600
    %v750 = vpop.f32.mrb[0].mxu0
    %v751 = vadd.f32 %v626, %v750
    %v752 = vpop.f32.mrb[0].mxu0
    %v753 = vpop.f32.mrb[0].mxu0
    %v754 = vadd.f32 %v626, %v753
    %v755 = vpop.f32.mrb[0].mxu0
    %756 = vmatprep.mubr.bf16.mxu0 0
    %757 = vmatmul.mubr.bf16.gmra.mrb[0].mxu0 %v601
    %v758 = vpop.f32.mrb[0].mxu0
    %v759 = vadd.f32 %v626, %v758
    %v760 = vpop.f32.mrb[0].mxu0
    %v761 = vpop.f32.mrb[0].mxu0
    %v762 = vadd.f32 %v626, %v761
    %v763 = vpop.f32.mrb[0].mxu0
    %764 = vmatprep.mubr.bf16.mxu0 0
    %765 = vmatmul.mubr.bf16.gmra.mrb[0].mxu0 %v602
    %v766 = vpop.f32.mrb[0].mxu0
    %v767 = vadd.f32 %v626, %v766
    %v768 = vpop.f32.mrb[0].mxu0
    %v769 = vpop.f32.mrb[0].mxu0
    %v770 = vadd.f32 %v626, %v769
    %v771 = vpop.f32.mrb[0].mxu0
    %772 = vdwg.mxu0
    %v773 = vpack.c.bf16 %v714, %v711
    %v774 = vpack.c.bf16 %v722, %v719
    %v775 = vpack.c.bf16 %v730, %v727
    %v776 = vpack.c.bf16 %v738, %v735
    %v777 = vpack.c.bf16 %v746, %v743
    %v778 = vpack.c.bf16 %v754, %v751
    %v779 = vpack.c.bf16 %v762, %v759
    %v780 = vpack.c.bf16 %v770, %v767
    %v781 = vmax.bf16 %v773, 0
    %v782 = vmax.bf16 %v774, 0
    %v783 = vmax.bf16 %v775, 0
    %v784 = vmax.bf16 %v776, 0
    %v785 = vmax.bf16 %v777, 0
    %v786 = vmax.bf16 %v778, 0
    %v787 = vmax.bf16 %v779, 0
    %v788 = vmax.bf16 %v780, 0
    %v789 = vand.u32 2147450879, %v773
    %v790 = vand.u32 2147450879, %v774
    %v791 = vand.u32 2147450879, %v775
    %v792 = vand.u32 2147450879, %v776
    %v793 = vand.u32 2147450879, %v777
    %v794 = vand.u32 2147450879, %v778
    %v795 = vand.u32 2147450879, %v779
    %v796 = vand.u32 2147450879, %v780
    %v797 = vsub.bf16 0, %v789
    %v798 = vsub.bf16 0, %v790
    %v799 = vsub.bf16 0, %v791
    %v800 = vsub.bf16 0, %v792
    %v801 = vsub.bf16 0, %v793
    %v802 = vsub.bf16 0, %v794
    %v803 = vsub.bf16 0, %v795
    %v804 = vsub.bf16 0, %v796
    %v806 = vmul.bf16 %v797, 1069105081
    %v807 = vpow.bf16.pop %v806
    %v809 = vmul.bf16 %v798, 1069105081
    %v810 = vpow.bf16.pop %v809
    %v812 = vmul.bf16 %v799, 1069105081
    %v813 = vpow.bf16.pop %v812
    %v815 = vmul.bf16 %v800, 1069105081
    %v816 = vpow.bf16.pop %v815
    %v818 = vmul.bf16 %v801, 1069105081
    %v819 = vpow.bf16.pop %v818
    %v821 = vmul.bf16 %v802, 1069105081
    %v822 = vpow.bf16.pop %v821
    %v824 = vmul.bf16 %v803, 1069105081
    %v825 = vpow.bf16.pop %v824
    %v827 = vmul.bf16 %v804, 1069105081
    %v828 = vpow.bf16.pop %v827
    %v829 = vadd.bf16 %v807, 1065369472
    %v830 = vadd.bf16 %v810, 1065369472
    %v831 = vadd.bf16 %v813, 1065369472
    %v832 = vadd.bf16 %v816, 1065369472
    %v833 = vadd.bf16 %v819, 1065369472
    %v834 = vadd.bf16 %v822, 1065369472
    %v835 = vadd.bf16 %v825, 1065369472
    %v836 = vadd.bf16 %v828, 1065369472
    %v837 = vlog2.bf16.pop %v829
    %v839 = vmul.bf16 %v837, 1060192049
    %v840 = vlog2.bf16.pop %v830
    %v842 = vmul.bf16 %v840, 1060192049
    %v843 = vlog2.bf16.pop %v831
    %v845 = vmul.bf16 %v843, 1060192049
    %v846 = vlog2.bf16.pop %v832
    %v848 = vmul.bf16 %v846, 1060192049
    %v849 = vlog2.bf16.pop %v833
    %v851 = vmul.bf16 %v849, 1060192049
    %v852 = vlog2.bf16.pop %v834
    %v854 = vmul.bf16 %v852, 1060192049
    %v855 = vlog2.bf16.pop %v835
    %v857 = vmul.bf16 %v855, 1060192049
    %v858 = vlog2.bf16.pop %v836
    %v860 = vmul.bf16 %v858, 1060192049
    %v861 = vadd.bf16 %v781, %v839
    %v862 = vadd.bf16 %v782, %v842
    %v863 = vadd.bf16 %v783, %v845
    %v864 = vadd.bf16 %v784, %v848
    %v865 = vadd.bf16 %v785, %v851
    %v866 = vadd.bf16 %v786, %v854
    %v867 = vadd.bf16 %v787, %v857
    %v868 = vadd.bf16 %v788, %v860
    %s869 = scalar_lea.vmem [#allocation2], 128
    %v870 = vld [vmem:[%s869] sm:$0xf]
    %v871 = vld [vmem:[%s869 + $0x4] sm:$0xf]
    %v872 = vld [vmem:[%s869 + $0x8] sm:$0xf]
    %v873 = vld [vmem:[%s869 + $0xc] sm:$0xf]
    %v874 = vld [vmem:[%s869 + $0x10] sm:$0xf]
    %v875 = vld [vmem:[%s869 + $0x14] sm:$0xf]
    %v876 = vld [vmem:[%s869 + $0x18] sm:$0xf]
    %v877 = vld [vmem:[%s869 + $0x1c] sm:$0xf]
    %v878 = vld [vmem:[%s869 + $0x20] sm:$0xf]
    %v879 = vld [vmem:[%s869 + $0x24] sm:$0xf]
    %v880 = vld [vmem:[%s869 + $0x28] sm:$0xf]
    %v881 = vld [vmem:[%s869 + $0x2c] sm:$0xf]
    %v882 = vld [vmem:[%s869 + $0x30] sm:$0xf]
    %v883 = vld [vmem:[%s869 + $0x34] sm:$0xf]
    %v884 = vld [vmem:[%s869 + $0x38] sm:$0xf]
    %v885 = vld [vmem:[%s869 + $0x3c] sm:$0xf]
    %s886 = scalar_lea.vmem %s3, 3
    %v887 = vld [vmem:[%s886] sm:$0x1]
    %v889 = vlaneseq
    %v890 = vshrl.u32 %v889, 7
    %v891 = vsub.s32 0, %v890
    %v892 = vrot.slane %v887, %v891
    %v910 = vunpack.c.l.b16 %v870
    %v911 = vunpack.c.l.b16 %v871
    %v912 = vunpack.c.l.b16 %v872
    %v913 = vunpack.c.l.b16 %v873
    %v914 = vunpack.c.l.b16 %v874
    %v915 = vunpack.c.l.b16 %v875
    %v916 = vunpack.c.l.b16 %v876
    %v917 = vunpack.c.l.b16 %v877
    %v918 = vunpack.c.l.b16 %v878
    %v919 = vunpack.c.l.b16 %v879
    %v920 = vunpack.c.l.b16 %v880
    %v921 = vunpack.c.l.b16 %v881
    %v922 = vunpack.c.l.b16 %v882
    %v923 = vunpack.c.l.b16 %v883
    %v924 = vunpack.c.l.b16 %v884
    %v925 = vunpack.c.l.b16 %v885
    %v926 = vpack.c.b16 %v911, %v910
    %v927 = vpack.c.b16 %v913, %v912
    %v928 = vpack.c.b16 %v915, %v914
    %v929 = vpack.c.b16 %v917, %v916
    %v930 = vpack.c.b16 %v919, %v918
    %v931 = vpack.c.b16 %v921, %v920
    %v932 = vpack.c.b16 %v923, %v922
    %v933 = vpack.c.b16 %v925, %v924
    %942 = vmatprep.subr.bf16.mxu0 0
    %943 = vmatpush1.bf16.msra.mxu0 %v926
    %944 = vmatprep.subr.bf16.mxu0 0
    %945 = vmatpush1.bf16.msra.mxu0 %v927
    %946 = vmatprep.subr.bf16.mxu0 0
    %947 = vmatpush1.bf16.msra.mxu0 %v928
    %948 = vmatprep.subr.bf16.mxu0 0
    %949 = vmatpush1.bf16.msra.mxu0 %v929
    %950 = vmatprep.subr.bf16.mxu0 0
    %951 = vmatpush1.bf16.msra.mxu0 %v930
    %952 = vmatprep.subr.bf16.mxu0 0
    %953 = vmatpush1.bf16.msra.mxu0 %v931
    %954 = vmatprep.subr.bf16.mxu0 0
    %955 = vmatpush1.bf16.msra.mxu0 %v932
    %956 = vmatprep.subr.bf16.mxu0 0
    %957 = vmatpush1.bf16.msra.mxu0 %v933
    %958 = vmatprep.subr.bf16.mxu0 0
    %959 = vmatpush1.bf16.msra.mxu0 0
    %960 = vmatprep.subr.bf16.mxu0 0
    %961 = vmatpush1.bf16.msra.mxu0 0
    %962 = vmatprep.subr.bf16.mxu0 0
    %963 = vmatpush1.bf16.msra.mxu0 0
    %964 = vmatprep.subr.bf16.mxu0 0
    %965 = vmatpush1.bf16.msra.mxu0 0
    %966 = vmatprep.subr.bf16.mxu0 0
    %967 = vmatpush1.bf16.msra.mxu0 0
    %968 = vmatprep.subr.bf16.mxu0 0
    %969 = vmatpush1.bf16.msra.mxu0 0
    %970 = vmatprep.subr.bf16.mxu0 0
    %971 = vmatpush1.bf16.msra.mxu0 0
    %972 = vmatprep.subr.bf16.mxu0 0
    %973 = vmatpush1.bf16.msra.mxu0 0
    %974 = vmatprep.mubr.bf16.mxu0 0
    %975 = vmatmul.mubr.bf16.gmra.mrb[0].mxu0 %v861
    %v976 = vpop.f32.mrb[0].mxu0
    %v977 = vadd.f32 %v892, %v976
    %v978 = vpop.f32.mrb[0].mxu0
    %v979 = vpop.f32.mrb[0].mxu0
    %v980 = vadd.f32 %v892, %v979
    %v981 = vpop.f32.mrb[0].mxu0
    %982 = vmatprep.mubr.bf16.mxu0 0
    %983 = vmatmul.mubr.bf16.gmra.mrb[0].mxu0 %v862
    %v984 = vpop.f32.mrb[0].mxu0
    %v985 = vadd.f32 %v892, %v984
    %v986 = vpop.f32.mrb[0].mxu0
    %v987 = vpop.f32.mrb[0].mxu0
    %v988 = vadd.f32 %v892, %v987
    %v989 = vpop.f32.mrb[0].mxu0
    %990 = vmatprep.mubr.bf16.mxu0 0
    %991 = vmatmul.mubr.bf16.gmra.mrb[0].mxu0 %v863
    %v992 = vpop.f32.mrb[0].mxu0
    %v993 = vadd.f32 %v892, %v992
    %v994 = vpop.f32.mrb[0].mxu0
    %v995 = vpop.f32.mrb[0].mxu0
    %v996 = vadd.f32 %v892, %v995
    %v997 = vpop.f32.mrb[0].mxu0
    %998 = vmatprep.mubr.bf16.mxu0 0
    %999 = vmatmul.mubr.bf16.gmra.mrb[0].mxu0 %v864
    %v1000 = vpop.f32.mrb[0].mxu0
    %v1001 = vadd.f32 %v892, %v1000
    %v1002 = vpop.f32.mrb[0].mxu0
    %v1003 = vpop.f32.mrb[0].mxu0
    %v1004 = vadd.f32 %v892, %v1003
    %v1005 = vpop.f32.mrb[0].mxu0
    %1006 = vmatprep.mubr.bf16.mxu0 0
    %1007 = vmatmul.mubr.bf16.gmra.mrb[0].mxu0 %v865
    %v1008 = vpop.f32.mrb[0].mxu0
    %v1009 = vadd.f32 %v892, %v1008
    %v1010 = vpop.f32.mrb[0].mxu0
    %v1011 = vpop.f32.mrb[0].mxu0
    %v1012 = vadd.f32 %v892, %v1011
    %v1013 = vpop.f32.mrb[0].mxu0
    %1014 = vmatprep.mubr.bf16.mxu0 0
    %1015 = vmatmul.mubr.bf16.gmra.mrb[0].mxu0 %v866
    %v1016 = vpop.f32.mrb[0].mxu0
    %v1017 = vadd.f32 %v892, %v1016
    %v1018 = vpop.f32.mrb[0].mxu0
    %v1019 = vpop.f32.mrb[0].mxu0
    %v1020 = vadd.f32 %v892, %v1019
    %v1021 = vpop.f32.mrb[0].mxu0
    %1022 = vmatprep.mubr.bf16.mxu0 0
    %1023 = vmatmul.mubr.bf16.gmra.mrb[0].mxu0 %v867
    %v1024 = vpop.f32.mrb[0].mxu0
    %v1025 = vadd.f32 %v892, %v1024
    %v1026 = vpop.f32.mrb[0].mxu0
    %v1027 = vpop.f32.mrb[0].mxu0
    %v1028 = vadd.f32 %v892, %v1027
    %v1029 = vpop.f32.mrb[0].mxu0
    %1030 = vmatprep.mubr.bf16.mxu0 0
    %1031 = vmatmul.mubr.bf16.gmra.mrb[0].mxu0 %v868
    %v1032 = vpop.f32.mrb[0].mxu0
    %v1033 = vadd.f32 %v892, %v1032
    %v1034 = vpop.f32.mrb[0].mxu0
    %v1035 = vpop.f32.mrb[0].mxu0
    %v1036 = vadd.f32 %v892, %v1035
    %v1037 = vpop.f32.mrb[0].mxu0
    %1038 = vdwg.mxu0
    %v1039 = vpack.c.bf16 %v980, %v977
    %v1040 = vpack.c.bf16 %v988, %v985
    %v1041 = vpack.c.bf16 %v996, %v993
    %v1042 = vpack.c.bf16 %v1004, %v1001
    %v1043 = vpack.c.bf16 %v1012, %v1009
    %v1044 = vpack.c.bf16 %v1020, %v1017
    %v1045 = vpack.c.bf16 %v1028, %v1025
    %v1046 = vpack.c.bf16 %v1036, %v1033
    %v1047 = vmax.bf16 %v1039, 0
    %v1048 = vmax.bf16 %v1040, 0
    %v1049 = vmax.bf16 %v1041, 0
    %v1050 = vmax.bf16 %v1042, 0
    %v1051 = vmax.bf16 %v1043, 0
    %v1052 = vmax.bf16 %v1044, 0
    %v1053 = vmax.bf16 %v1045, 0
    %v1054 = vmax.bf16 %v1046, 0
    %v1055 = vand.u32 2147450879, %v1039
    %v1056 = vand.u32 2147450879, %v1040
    %v1057 = vand.u32 2147450879, %v1041
    %v1058 = vand.u32 2147450879, %v1042
    %v1059 = vand.u32 2147450879, %v1043
    %v1060 = vand.u32 2147450879, %v1044
    %v1061 = vand.u32 2147450879, %v1045
    %v1062 = vand.u32 2147450879, %v1046
    %v1063 = vsub.bf16 0, %v1055
    %v1064 = vsub.bf16 0, %v1056
    %v1065 = vsub.bf16 0, %v1057
    %v1066 = vsub.bf16 0, %v1058
    %v1067 = vsub.bf16 0, %v1059
    %v1068 = vsub.bf16 0, %v1060
    %v1069 = vsub.bf16 0, %v1061
    %v1070 = vsub.bf16 0, %v1062
    %v1072 = vmul.bf16 %v1063, 1069105081
    %v1073 = vpow.bf16.pop %v1072
    %v1075 = vmul.bf16 %v1064, 1069105081
    %v1076 = vpow.bf16.pop %v1075
    %v1078 = vmul.bf16 %v1065, 1069105081
    %v1079 = vpow.bf16.pop %v1078
    %v1081 = vmul.bf16 %v1066, 1069105081
    %v1082 = vpow.bf16.pop %v1081
    %v1084 = vmul.bf16 %v1067, 1069105081
    %v1085 = vpow.bf16.pop %v1084
    %v1087 = vmul.bf16 %v1068, 1069105081
    %v1088 = vpow.bf16.pop %v1087
    %v1090 = vmul.bf16 %v1069, 1069105081
    %v1091 = vpow.bf16.pop %v1090
    %v1093 = vmul.bf16 %v1070, 1069105081
    %v1094 = vpow.bf16.pop %v1093
    %v1095 = vadd.bf16 %v1073, 1065369472
    %v1096 = vadd.bf16 %v1076, 1065369472
    %v1097 = vadd.bf16 %v1079, 1065369472
    %v1098 = vadd.bf16 %v1082, 1065369472
    %v1099 = vadd.bf16 %v1085, 1065369472
    %v1100 = vadd.bf16 %v1088, 1065369472
    %v1101 = vadd.bf16 %v1091, 1065369472
    %v1102 = vadd.bf16 %v1094, 1065369472
    %v1103 = vlog2.bf16.pop %v1095
    %v1105 = vmul.bf16 %v1103, 1060192049
    %v1106 = vlog2.bf16.pop %v1096
    %v1108 = vmul.bf16 %v1106, 1060192049
    %v1109 = vlog2.bf16.pop %v1097
    %v1111 = vmul.bf16 %v1109, 1060192049
    %v1112 = vlog2.bf16.pop %v1098
    %v1114 = vmul.bf16 %v1112, 1060192049
    %v1115 = vlog2.bf16.pop %v1099
    %v1117 = vmul.bf16 %v1115, 1060192049
    %v1118 = vlog2.bf16.pop %v1100
    %v1120 = vmul.bf16 %v1118, 1060192049
    %v1121 = vlog2.bf16.pop %v1101
    %v1123 = vmul.bf16 %v1121, 1060192049
    %v1124 = vlog2.bf16.pop %v1102
    %v1126 = vmul.bf16 %v1124, 1060192049
    %v1127 = vadd.bf16 %v1047, %v1105
    %v1128 = vadd.bf16 %v1048, %v1108
    %v1129 = vadd.bf16 %v1049, %v1111
    %v1130 = vadd.bf16 %v1050, %v1114
    %v1131 = vadd.bf16 %v1051, %v1117
    %v1132 = vadd.bf16 %v1052, %v1120
    %v1133 = vadd.bf16 %v1053, %v1123
    %v1134 = vadd.bf16 %v1054, %v1126
    %v1135 = vunpack.c.l.bf16 %v1127
    %v1136 = vunpack.c.h.bf16 %v1127
    %v1137 = vunpack.c.l.bf16 %v1128
    %v1138 = vunpack.c.h.bf16 %v1128
    %v1139 = vunpack.c.l.bf16 %v1129
    %v1140 = vunpack.c.h.bf16 %v1129
    %v1141 = vunpack.c.l.bf16 %v1130
    %v1142 = vunpack.c.h.bf16 %v1130
    %v1143 = vunpack.c.l.bf16 %v1131
    %v1144 = vunpack.c.h.bf16 %v1131
    %v1145 = vunpack.c.l.bf16 %v1132
    %v1146 = vunpack.c.h.bf16 %v1132
    %v1147 = vunpack.c.l.bf16 %v1133
    %v1148 = vunpack.c.h.bf16 %v1133
    %v1149 = vunpack.c.l.bf16 %v1134
    %v1150 = vunpack.c.h.bf16 %v1134
    %v1151 = vmul.f32 %v1135, 2.0
    %v1152 = vmul.f32 %v1136, 2.0
    %v1153 = vmul.f32 %v1137, 2.0
    %v1154 = vmul.f32 %v1138, 2.0
    %v1155 = vmul.f32 %v1139, 2.0
    %v1156 = vmul.f32 %v1140, 2.0
    %v1157 = vmul.f32 %v1141, 2.0
    %v1158 = vmul.f32 %v1142, 2.0
    %v1159 = vmul.f32 %v1143, 2.0
    %v1160 = vmul.f32 %v1144, 2.0
    %v1161 = vmul.f32 %v1145, 2.0
    %v1162 = vmul.f32 %v1146, 2.0
    %v1163 = vmul.f32 %v1147, 2.0
    %v1164 = vmul.f32 %v1148, 2.0
    %v1165 = vmul.f32 %v1149, 2.0
    %v1166 = vmul.f32 %v1150, 2.0
    %v1167 = vsub.f32 %v1151, 1.3862944
    %v1168 = vsub.f32 %v1152, 1.3862944
    %v1169 = vsub.f32 %v1153, 1.3862944
    %v1170 = vsub.f32 %v1154, 1.3862944
    %v1171 = vsub.f32 %v1155, 1.3862944
    %v1172 = vsub.f32 %v1156, 1.3862944
    %v1173 = vsub.f32 %v1157, 1.3862944
    %v1174 = vsub.f32 %v1158, 1.3862944
    %v1175 = vsub.f32 %v1159, 1.3862944
    %v1176 = vsub.f32 %v1160, 1.3862944
    %v1177 = vsub.f32 %v1161, 1.3862944
    %v1178 = vsub.f32 %v1162, 1.3862944
    %v1179 = vsub.f32 %v1163, 1.3862944
    %v1180 = vsub.f32 %v1164, 1.3862944
    %v1181 = vsub.f32 %v1165, 1.3862944
    %v1182 = vsub.f32 %v1166, 1.3862944
    %1183 = vst [vmem:[%s4] sm:$0xff] %v1167
    %1184 = vst [vmem:[%s4 + $0x8] sm:$0xff] %v1168
    %1185 = vst [vmem:[%s4 + $0x10] sm:$0xff] %v1169
    %1186 = vst [vmem:[%s4 + $0x18] sm:$0xff] %v1170
    %1187 = vst [vmem:[%s4 + $0x20] sm:$0xff] %v1171
    %1188 = vst [vmem:[%s4 + $0x28] sm:$0xff] %v1172
    %1189 = vst [vmem:[%s4 + $0x30] sm:$0xff] %v1173
    %1190 = vst [vmem:[%s4 + $0x38] sm:$0xff] %v1174
    %1191 = vst [vmem:[%s4 + $0x40] sm:$0xff] %v1175
    %1192 = vst [vmem:[%s4 + $0x48] sm:$0xff] %v1176
    %1193 = vst [vmem:[%s4 + $0x50] sm:$0xff] %v1177
    %1194 = vst [vmem:[%s4 + $0x58] sm:$0xff] %v1178
    %1195 = vst [vmem:[%s4 + $0x60] sm:$0xff] %v1179
    %1196 = vst [vmem:[%s4 + $0x68] sm:$0xff] %v1180
    %1197 = vst [vmem:[%s4 + $0x70] sm:$0xff] %v1181
    %1198 = vst [vmem:[%s4 + $0x78] sm:$0xff] %v1182
    // Predicated region
    $region22: #{encoder_forward.1} parent=1 // pred_check
      _
    $region23: #{encoder_forward.1} parent=1 // pred_check_branch
      %1200 = sbr.rel (0) target = $region25
    $region24: #{encoder_forward.1} parent=1 // pred_region
      _
    $region25: #{encoder_forward.1} parent=1 // pred_fallthru
      _
    // Predicated region
    $region26: #{encoder_forward.1} parent=1 // pred_check
      _
    $region27: #{encoder_forward.1} parent=1 // pred_check_branch
      %1202 = sbr.rel (0) target = $region29
    $region28: #{encoder_forward.1} parent=1 // pred_region
      _
    $region29: #{encoder_forward.1} parent=1 // pred_fallthru
      _
    %1203 = vsyncpa [#allocation3], 1

</llo_original>
